<compile_context>
chip_gen: v6e
topology: v6e:2x2x1
jax: 0.10.0
libtpu: 0.0.40
codegen_flags: <defaults>
</compile_context>

<pallas_src>
import jax
import jax.numpy as jnp
from jax.experimental import pallas as pl
from jax.experimental.pallas import tpu as pltpu


def _round_up(a, m):
    return ((a + m - 1) // m) * m


def xornet_kernel(p_ref, x_ref, o_ref):
    """p_ref: SMEM f32[11] = [w1(3x2 row-major), b1(2), w2(2), b2(1)].

    x_ref: VMEM (3, TR, 128)  — feature on leading dim, batch dense on
           sublanes (TR) and lanes (128).
    o_ref: VMEM (TR, 128).
    """
    x0 = x_ref[0]  # (TR, 128) — leading-dim index is a free Ref view
    x1 = x_ref[1]
    x2 = x_ref[2]

    # Hidden layer: z_j = sum_k x_k * w1[k, j] + b1[j]   (w1[k, j] = p[2k + j])
    z0 = x0 * p_ref[0] + x1 * p_ref[2] + x2 * p_ref[4] + p_ref[6]
    z1 = x0 * p_ref[1] + x1 * p_ref[3] + x2 * p_ref[5] + p_ref[7]

    # Single-EUP sigmoid: sigmoid(z) = 0.5 * (tanh(0.5 * z) + 1)
    h0 = 0.5 * jnp.tanh(0.5 * z0) + 0.5
    h1 = 0.5 * jnp.tanh(0.5 * z1) + 0.5

    # Output layer: y = h0 * w2[0] + h1 * w2[1] + b2
    y = h0 * p_ref[8] + h1 * p_ref[9] + p_ref[10]
    o_ref[...] = (0.5 * jnp.tanh(0.5 * y) + 0.5).astype(o_ref.dtype)


def xornet_forward(x, w1, b1, w2, b2, *, tr=None):
    """x: (B, 3) f32; w1: (3, 2) (in, out); b1: (1, 2); w2: (2, 1); b2: (1, 1).

    Returns (B, 1) f32, matching PyTorch XORNet.forward.
    """
    B = x.shape[0]
    R = pl.cdiv(B, 128)  # batch rows of 128 lanes each

    if tr is None:
        # Aim for >= 2 balanced grid steps (v7x has 2 TCs) while keeping each
        # step MiB-scale; cap at 1024 rows (= 128K lanes, ~2 MiB of f32 per step).
        tr = min(1024, max(8, _round_up(pl.cdiv(R, 2), 8)))
    tr = _round_up(tr, 8)

    n_tiles = pl.cdiv(R, tr)
    r_pad = n_tiles * tr
    b_pad = r_pad * 128

    # Feature-major dense slab: (3, r_pad, 128), zero-padded only to block granularity.
    x_t = jnp.pad(x.astype(jnp.float32).T, ((0, 0), (0, b_pad - B)))
    x_t = x_t.reshape(3, r_pad, 128)

    # Pack all 11 parameter scalars into a single SMEM-prefetched vector.
    params = jnp.concatenate(
        [
            w1.reshape(-1).astype(jnp.float32),  # 6: w1[k, j] at index 2k + j
            b1.reshape(-1).astype(jnp.float32),  # 2
            w2.reshape(-1).astype(jnp.float32),  # 2
            b2.reshape(-1).astype(jnp.float32),  # 1
        ]
    )

    # Double-buffered VMEM footprint for the chosen tile, with headroom,
    # clamped under the v7x 64 MiB physical ceiling.
    block_bytes = (3 * tr * 128 + tr * 128) * 4
    vmem_limit = min(max(4 * block_bytes, 16 * 1024 * 1024), 48 * 1024 * 1024)

    out = pl.pallas_call(
        xornet_kernel,
        out_shape=jax.ShapeDtypeStruct((r_pad, 128), jnp.float32),
        grid_spec=pltpu.PrefetchScalarGridSpec(
            num_scalar_prefetch=1,
            grid=(n_tiles,),
            in_specs=[
                pl.BlockSpec((3, tr, 128), lambda i, p: (0, i, 0)),
            ],
            out_specs=pl.BlockSpec((tr, 128), lambda i, p: (i, 0)),
        ),
        compiler_params=pltpu.CompilerParams(
            dimension_semantics=("parallel",),
            vmem_limit_bytes=vmem_limit,
        ),
    )(params, x_t)

    return out.reshape(-1)[:B].reshape(B, 1)


def init_params():
    # Deterministic init mimicking PyTorch nn.Linear's U(-1/sqrt(fan_in), ...).
    k = jax.random.PRNGKey(0)
    k1, k2, k3, k4 = jax.random.split(k, 4)
    bound1 = 1.0 / jnp.sqrt(3.0)
    bound2 = 1.0 / jnp.sqrt(2.0)
    w1 = jax.random.uniform(k1, (3, 2), jnp.float32, -bound1, bound1)  # (in, out)
    b1 = jax.random.uniform(k2, (1, 2), jnp.float32, -bound1, bound1)
    w2 = jax.random.uniform(k3, (2, 1), jnp.float32, -bound2, bound2)
    b2 = jax.random.uniform(k4, (1, 1), jnp.float32, -bound2, bound2)
    return w1, b1, w2, b2


def reference_forward(x, w1, b1, w2, b2):
    h = jax.nn.sigmoid(x @ w1 + b1)
    return jax.nn.sigmoid(h @ w2 + b2)


if __name__ == "__main__":
    w1, b1, w2, b2 = init_params()

    # Small demo batch (single grid step).
    batch = 8
    key = jax.random.PRNGKey(0)
    x = jax.random.normal(key, (batch, 3), jnp.float32)

    out = xornet_forward(x, w1, b1, w2, b2)
    out = jax.block_until_ready(out)
    ref = reference_forward(x, w1, b1, w2, b2)
    assert out.shape == (batch, 1)
    assert jnp.allclose(out, ref, atol=1e-5, rtol=1e-5)

    # Ragged batch crossing a 128-lane row boundary (exercises padding path).
    batch2 = 600
    x2 = jax.random.normal(jax.random.PRNGKey(1), (batch2, 3), jnp.float32)
    out2 = jax.block_until_ready(xornet_forward(x2, w1, b1, w2, b2))
    ref2 = reference_forward(x2, w1, b1, w2, b2)
    assert out2.shape == (batch2, 1)
    assert jnp.allclose(out2, ref2, atol=1e-5, rtol=1e-5)

    # Larger batch forcing multiple grid steps (exercises tiling / parallel axis).
    batch3 = 5 * 1024
    x3 = jax.random.normal(jax.random.PRNGKey(2), (batch3, 3), jnp.float32)
    out3 = jax.block_until_ready(xornet_forward(x3, w1, b1, w2, b2))
    ref3 = reference_forward(x3, w1, b1, w2, b2)
    assert out3.shape == (batch3, 1)
    assert jnp.allclose(out3, ref3, atol=1e-5, rtol=1e-5)

    print("KERNEL_OK")
</pallas_src>

<mosaic_0001>
module attributes {stable_mosaic.version = 11 : i64} {
  func.func @xornet_kernel(%arg0: i32, %arg1: memref<11xf32, #tpu.memory_space<smem>>, %arg2: memref<3x8x128xf32, #tpu.memory_space<vmem>>, %arg3: memref<8x128xf32, #tpu.memory_space<vmem>>) attributes {dimension_semantics = [#tpu.dimension_semantics<parallel>], iteration_bounds = array<i64: 1>, scalar_prefetch = 1 : i64, scratch_operands = 0 : i64, tpu.core_type = #tpu.core_type<tc>, window_params = [{transform_indices = @transform_0, window_bounds = array<i64: 3, 8, 128>}, {transform_indices = @transform_1, window_bounds = array<i64: 8, 128>}]} {
    %c0 = arith.constant 0 : index
    %c0_0 = arith.constant 0 : index
    %c0_1 = arith.constant 0 : index
    %0 = vector.load %arg2[%c0, %c0_0, %c0_1] : memref<3x8x128xf32, #tpu.memory_space<vmem>>, vector<1x8x128xf32>
    %1 = vector.shape_cast %0 : vector<1x8x128xf32> to vector<8x128xf32>
    %c1 = arith.constant 1 : index
    %c0_2 = arith.constant 0 : index
    %c0_3 = arith.constant 0 : index
    %2 = vector.load %arg2[%c1, %c0_2, %c0_3] : memref<3x8x128xf32, #tpu.memory_space<vmem>>, vector<1x8x128xf32>
    %3 = vector.shape_cast %2 : vector<1x8x128xf32> to vector<8x128xf32>
    %c2 = arith.constant 2 : index
    %c0_4 = arith.constant 0 : index
    %c0_5 = arith.constant 0 : index
    %4 = vector.load %arg2[%c2, %c0_4, %c0_5] : memref<3x8x128xf32, #tpu.memory_space<vmem>>, vector<1x8x128xf32>
    %5 = vector.shape_cast %4 : vector<1x8x128xf32> to vector<8x128xf32>
    %c0_6 = arith.constant 0 : index
    %6 = memref.load %arg1[%c0_6] : memref<11xf32, #tpu.memory_space<smem>>
    %7 = vector.broadcast %6 : f32 to vector<8x128xf32>
    %8 = arith.mulf %1, %7 : vector<8x128xf32>
    %c2_7 = arith.constant 2 : index
    %9 = memref.load %arg1[%c2_7] : memref<11xf32, #tpu.memory_space<smem>>
    %10 = vector.broadcast %9 : f32 to vector<8x128xf32>
    %11 = arith.mulf %3, %10 : vector<8x128xf32>
    %12 = arith.addf %8, %11 : vector<8x128xf32>
    %c4 = arith.constant 4 : index
    %13 = memref.load %arg1[%c4] : memref<11xf32, #tpu.memory_space<smem>>
    %14 = vector.broadcast %13 : f32 to vector<8x128xf32>
    %15 = arith.mulf %5, %14 : vector<8x128xf32>
    %16 = arith.addf %12, %15 : vector<8x128xf32>
    %c6 = arith.constant 6 : index
    %17 = memref.load %arg1[%c6] : memref<11xf32, #tpu.memory_space<smem>>
    %18 = vector.broadcast %17 : f32 to vector<8x128xf32>
    %19 = arith.addf %16, %18 : vector<8x128xf32>
    %c1_8 = arith.constant 1 : index
    %20 = memref.load %arg1[%c1_8] : memref<11xf32, #tpu.memory_space<smem>>
    %21 = vector.broadcast %20 : f32 to vector<8x128xf32>
    %22 = arith.mulf %1, %21 : vector<8x128xf32>
    %c3 = arith.constant 3 : index
    %23 = memref.load %arg1[%c3] : memref<11xf32, #tpu.memory_space<smem>>
    %24 = vector.broadcast %23 : f32 to vector<8x128xf32>
    %25 = arith.mulf %3, %24 : vector<8x128xf32>
    %26 = arith.addf %22, %25 : vector<8x128xf32>
    %c5 = arith.constant 5 : index
    %27 = memref.load %arg1[%c5] : memref<11xf32, #tpu.memory_space<smem>>
    %28 = vector.broadcast %27 : f32 to vector<8x128xf32>
    %29 = arith.mulf %5, %28 : vector<8x128xf32>
    %30 = arith.addf %26, %29 : vector<8x128xf32>
    %c7 = arith.constant 7 : index
    %31 = memref.load %arg1[%c7] : memref<11xf32, #tpu.memory_space<smem>>
    %32 = vector.broadcast %31 : f32 to vector<8x128xf32>
    %33 = arith.addf %30, %32 : vector<8x128xf32>
    %cst = arith.constant 5.000000e-01 : f32
    %34 = vector.broadcast %cst : f32 to vector<8x128xf32>
    %35 = arith.mulf %34, %19 : vector<8x128xf32>
    %36 = math.tanh %35 : vector<8x128xf32>
    %cst_9 = arith.constant 5.000000e-01 : f32
    %37 = vector.broadcast %cst_9 : f32 to vector<8x128xf32>
    %38 = arith.mulf %37, %36 : vector<8x128xf32>
    %cst_10 = arith.constant 5.000000e-01 : f32
    %39 = vector.broadcast %cst_10 : f32 to vector<8x128xf32>
    %40 = arith.addf %38, %39 : vector<8x128xf32>
    %cst_11 = arith.constant 5.000000e-01 : f32
    %41 = vector.broadcast %cst_11 : f32 to vector<8x128xf32>
    %42 = arith.mulf %41, %33 : vector<8x128xf32>
    %43 = math.tanh %42 : vector<8x128xf32>
    %cst_12 = arith.constant 5.000000e-01 : f32
    %44 = vector.broadcast %cst_12 : f32 to vector<8x128xf32>
    %45 = arith.mulf %44, %43 : vector<8x128xf32>
    %cst_13 = arith.constant 5.000000e-01 : f32
    %46 = vector.broadcast %cst_13 : f32 to vector<8x128xf32>
    %47 = arith.addf %45, %46 : vector<8x128xf32>
    %c8 = arith.constant 8 : index
    %48 = memref.load %arg1[%c8] : memref<11xf32, #tpu.memory_space<smem>>
    %49 = vector.broadcast %48 : f32 to vector<8x128xf32>
    %50 = arith.mulf %40, %49 : vector<8x128xf32>
    %c9 = arith.constant 9 : index
    %51 = memref.load %arg1[%c9] : memref<11xf32, #tpu.memory_space<smem>>
    %52 = vector.broadcast %51 : f32 to vector<8x128xf32>
    %53 = arith.mulf %47, %52 : vector<8x128xf32>
    %54 = arith.addf %50, %53 : vector<8x128xf32>
    %c10 = arith.constant 10 : index
    %55 = memref.load %arg1[%c10] : memref<11xf32, #tpu.memory_space<smem>>
    %56 = vector.broadcast %55 : f32 to vector<8x128xf32>
    %57 = arith.addf %54, %56 : vector<8x128xf32>
    %cst_14 = arith.constant 5.000000e-01 : f32
    %58 = vector.broadcast %cst_14 : f32 to vector<8x128xf32>
    %59 = arith.mulf %58, %57 : vector<8x128xf32>
    %60 = math.tanh %59 : vector<8x128xf32>
    %cst_15 = arith.constant 5.000000e-01 : f32
    %61 = vector.broadcast %cst_15 : f32 to vector<8x128xf32>
    %62 = arith.mulf %61, %60 : vector<8x128xf32>
    %cst_16 = arith.constant 5.000000e-01 : f32
    %63 = vector.broadcast %cst_16 : f32 to vector<8x128xf32>
    %64 = arith.addf %62, %63 : vector<8x128xf32>
    %c0_17 = arith.constant 0 : index
    %c0_18 = arith.constant 0 : index
    %65 = vector.load %arg3[%c0_17, %c0_18] : memref<8x128xf32, #tpu.memory_space<vmem>>, vector<8x128xf32>
    tpu.vector_store %arg3[%c0_17, %c0_18], %64 {strides = array<i32>} : memref<8x128xf32, #tpu.memory_space<vmem>>, vector<8x128xf32>,
    return
  }
  func.func @transform_0(%arg0: i32, %arg1: memref<11xf32, #tpu.memory_space<smem>>) -> (i32, i32, i32) {
    %c0_i32 = arith.constant 0 : i32
    %c0_i32_0 = arith.constant 0 : i32
    %c0_i32_1 = arith.constant 0 : i32
    return %c0_i32, %arg0, %c0_i32_0 : i32, i32, i32
  }
  func.func @transform_1(%arg0: i32, %arg1: memref<11xf32, #tpu.memory_space<smem>>) -> (i32, i32) {
    %c0_i32 = arith.constant 0 : i32
    %c0_i32_0 = arith.constant 0 : i32
    return %arg0, %c0_i32 : i32, i32
  }
}

</mosaic_0001>

<llo_original>
// kernel: tpu_custom_call.1
$region0: #{tpu_custom_call.1}
  #allocation0 [shape = 'u32[]', space=smem, size = 0x4, offset = 0x4, fixed_abs, tag = 'smem constant byte address 0x4 - core index']
  #allocation1 [shape = 'u32[144,128]{1,0:T(1,128)}', space=vmem, size = 0x12000, scoped, tag = 'internal scratch']
  #allocation2 [shape = 's32[1]{0}', space=sflag, size = 0x4, scoped, tag = 'scoped memory for tpu_custom_call.1']
  #allocation3 [shape = 'u8[512]{0}', space=smem, size = 0x200, scoped, tag = 'prefetched SMEM operand 0']
  %s0 = inlined_call_operand.hbm [shape: f32[11], index: 0, kind: input, shape index: {}]
  %s1 = inlined_call_operand.hbm [shape: f32[3,8,128], index: 1, kind: input, shape index: {}]
  %s2 = inlined_call_operand.hbm [shape: f32[8,128], index: 2, kind: output, shape index: {}]
  %s3 = sld [smem:[#allocation0]]
  $region18: #{tpu_custom_call.1} parent=0
    _
  %s5 = ssub.s32 1, %s3
  %s6 = scalar_select 0, %s5, %s3
  %8 = dma.hbm_to_smem %s0, 16, [#allocation3], [#allocation2]
  %9 = dma.done [#allocation2], 16
  %10 = sfence
  $region1: #{tpu_custom_call.1} parent=0
    #allocation4 [shape = 'u8[12288]{0}', space=vmem, size = 0x3000, scoped, tag = 'input window, operand 1, single buffered']
    #allocation5 [shape = 's32[1]{0}', space=sflag, size = 0x4, scoped, tag = 'scoped memory for tpu_custom_call.1']
    #allocation6 [shape = 's32[1]{0}', space=sflag, size = 0x4, scoped, tag = 'scoped memory for tpu_custom_call.1']
    #allocation7 [shape = 'u8[4096]{0}', space=vmem, size = 0x1000, scoped, tag = 'output window, operand 0, single buffered']
    %11 = vsyncpa [#allocation5], 0
    %12 = vsyncpa [#allocation6], 0
    // Predicated region
    $region2: #{tpu_custom_call.1} parent=1 // pred_check
      _
    $region3: #{tpu_custom_call.1} parent=1 // pred_check_branch
      %14 = sbr.rel (0) target = $region5
    $region4: #{tpu_custom_call.1} parent=1 // pred_region
      %s16 = ssub.s32 384, 384
      %17 = vsyncadd [#allocation5], %s16
      %s18 = sshll.u32 [#allocation4], 4
      %s19 = int_to_ptr.vmem [resolvable:$true] %s18
      %24 = dma.hbm_to_vmem [thread:$0]  %s1, 384, %s19, [#allocation5], 128, 128, 8
    $region5: #{tpu_custom_call.1} parent=1 // pred_fallthru
      _
    // Predicated region
    $region6: #{tpu_custom_call.1} parent=1 // pred_check
      _
    $region7: #{tpu_custom_call.1} parent=1 // pred_check_branch
      %26 = sbr.rel (0) target = $region9
    $region8: #{tpu_custom_call.1} parent=1 // pred_region
      %27 = dma.done [#allocation5], 384
    $region9: #{tpu_custom_call.1} parent=1 // pred_fallthru
      _
    %v28 = vld [vmem:[#allocation4] sm:$0xff]
    %s29 = scalar_lea.vmem [#allocation4], 8
    %v30 = vld [vmem:[%s29] sm:$0xff]
    %s31 = scalar_lea.vmem [#allocation4], 16
    %v32 = vld [vmem:[%s31] sm:$0xff]
    %s33 = sld [smem:[#allocation3]]
    %v34 = vstv %s33
    %v35 = vmul.f32 %v28, %v34
    %s36 = sld [smem:[#allocation3 + $0x2]]
    %v37 = vstv %s36
    %v38 = vmul.f32 %v30, %v37
    %v39 = vadd.f32 %v35, %v38
    %s40 = sld [smem:[#allocation3 + $0x4]]
    %v41 = vstv %s40
    %v42 = vmul.f32 %v32, %v41
    %v43 = vadd.f32 %v39, %v42
    %s44 = sld [smem:[#allocation3 + $0x6]]
    %v45 = vstv %s44
    %v46 = vadd.f32 %v43, %v45
    %s47 = sld [smem:[#allocation3 + $0x1]]
    %v48 = vstv %s47
    %v49 = vmul.f32 %v28, %v48
    %s50 = sld [smem:[#allocation3 + $0x3]]
    %v51 = vstv %s50
    %v52 = vmul.f32 %v30, %v51
    %v53 = vadd.f32 %v49, %v52
    %s54 = sld [smem:[#allocation3 + $0x5]]
    %v55 = vstv %s54
    %v56 = vmul.f32 %v32, %v55
    %v57 = vadd.f32 %v53, %v56
    %s58 = sld [smem:[#allocation3 + $0x7]]
    %v59 = vstv %s58
    %v60 = vadd.f32 %v57, %v59
    %v61 = vmul.f32 %v46, 0.5
    %v62 = vtanh.pop %v61
    %v63 = vmul.f32 %v62, 0.5
    %v64 = vadd.f32 %v63, 0.5
    %v65 = vmul.f32 %v60, 0.5
    %v66 = vtanh.pop %v65
    %v67 = vmul.f32 %v66, 0.5
    %v68 = vadd.f32 %v67, 0.5
    %s69 = sld [smem:[#allocation3 + $0x8]]
    %v70 = vstv %s69
    %v71 = vmul.f32 %v64, %v70
    %s72 = sld [smem:[#allocation3 + $0x9]]
    %v73 = vstv %s72
    %v74 = vmul.f32 %v68, %v73
    %v75 = vadd.f32 %v71, %v74
    %s76 = sld [smem:[#allocation3 + $0xa]]
    %v77 = vstv %s76
    %v78 = vadd.f32 %v75, %v77
    %v79 = vmul.f32 %v78, 0.5
    %v80 = vtanh.pop %v79
    %v81 = vmul.f32 %v80, 0.5
    %v82 = vadd.f32 %v81, 0.5
    %83 = vst [vmem:[#allocation7] sm:$0xff] %v82
    // Predicated region
    $region10: #{tpu_custom_call.1} parent=1 // pred_check
      _
    $region11: #{tpu_custom_call.1} parent=1 // pred_check_branch
      %85 = sbr.rel (0) target = $region13
    $region12: #{tpu_custom_call.1} parent=1 // pred_region
      %s87 = ssub.s32 128, 128
      %88 = vsyncadd [#allocation6], %s87
      %s90 = sshll.u32 [#allocation7], 4
      %s91 = int_to_ptr.vmem [resolvable:$true] %s90
      %93 = dma.vmem_to_hbm [thread:$0]  %s91, 128, %s2, [#allocation6]
    $region13: #{tpu_custom_call.1} parent=1 // pred_fallthru
      _
    // Predicated region
    $region14: #{tpu_custom_call.1} parent=1 // pred_check
      _
    $region15: #{tpu_custom_call.1} parent=1 // pred_check_branch
      %95 = sbr.rel (0) target = $region17
    $region16: #{tpu_custom_call.1} parent=1 // pred_region
      %96 = dma.done [#allocation6], 128
    $region17: #{tpu_custom_call.1} parent=1 // pred_fallthru
      _
    %97 = vsyncpa [#allocation5], 1
    %98 = vsyncpa [#allocation6], 1

</llo_original>
